<compile_context>
chip_gen: v6e
topology: v6e:2x2x1
jax: 0.10.0
libtpu: 0.0.40
codegen_flags: <defaults>
</compile_context>

<pallas_src>
import jax
import jax.numpy as jnp
from jax.experimental import pallas as pl
from jax.experimental.pallas import tpu as pltpu


def mlp_kernel(xt_ref, w1c0_ref, w1c1_ref, b1_ref,
               w2t_ref, b2_ref, w3t_ref, b3_ref,
               w4c_ref, b4_ref, o_ref):
    xt = xt_ref[...]                                   # [2, bm]  f32

    # fc1: K=2 -> VPU outer product (don't waste the MXU on K=2). f32 on VPU.
    h = (w1c0_ref[...] * xt[0:1, :]
         + w1c1_ref[...] * xt[1:2, :]
         + b1_ref[...])                                # [128, bm]
    h = jnp.maximum(h, 0.0)                            # dropout == identity (eval)

    # fc2: [64,128] @ [128,bm] on the MXU, bf16 inputs, f32 accumulation.
    h = jnp.dot(w2t_ref[...], h.astype(jnp.bfloat16),
                preferred_element_type=jnp.float32) + b2_ref[...]
    h = jnp.maximum(h, 0.0)                            # [64, bm]

    # fc3: [8,64] @ [64,bm] on the MXU, bf16 inputs, f32 accumulation.
    h = jnp.dot(w3t_ref[...], h.astype(jnp.bfloat16),
                preferred_element_type=jnp.float32) + b3_ref[...]
    h = jnp.maximum(h, 0.0)                            # [8, bm]

    # fc4: N=1 -> VPU multiply + sublane reduction; output stays lane-dense.
    o_ref[...] = jnp.sum(h * w4c_ref[...], axis=0, keepdims=True) + b4_ref[...]


def _auto_block_m(batch, max_block_m=8192):
    """Largest lane-aligned tile, capped so large batches give >= 2 tiles
    (v7x has 2 TensorCores sharded by the 'parallel' grid axis)."""
    half = -(-batch // 2)                              # cdiv(batch, 2)
    bm = ((half + 127) // 128) * 128
    return max(128, min(max_block_m, bm))


def backbone_forward(x, params, *, block_m=None, max_block_m=8192):
    """x: [B, 2] float32.  params: kernel-layout weights (see init_params).

    Returns [B, 1] float32, matching the PyTorch module's forward (eval mode).
    """
    B, fin = x.shape
    assert fin == 2, "fc1 expects 2 input features"
    if block_m is None:
        block_m = _auto_block_m(B, max_block_m)
    assert block_m % 128 == 0, "block_m must be a multiple of 128 (lane width)"

    num_tiles = pl.cdiv(B, block_m)                    # any batch size works
    b_pad = num_tiles * block_m

    # Lane-dense padded input via a single fused transpose+pad (no explicit
    # zeros().at[].set() materialization).
    xt = jnp.pad(x.astype(jnp.float32).T, ((0, 0), (0, b_pad - B)))

    w1c0, w1c1, b1 = params["w1c0"], params["w1c1"], params["b1"]   # [128,1]x2, [128,1]
    w2t = params["w2t"].astype(jnp.bfloat16)                        # [64,128] bf16
    w3t = params["w3t"].astype(jnp.bfloat16)                        # [8,64]   bf16
    b2, b3 = params["b2"], params["b3"]                             # [64,1], [8,1]
    w4c, b4 = params["w4c"], params["b4"]                           # [8,1],  [1,1]

    full = lambda arr: pl.BlockSpec(arr.shape, lambda i: (0, 0))    # resident weights

    out = pl.pallas_call(
        mlp_kernel,
        out_shape=jax.ShapeDtypeStruct((1, b_pad), jnp.float32),
        grid=(num_tiles,),
        in_specs=[
            pl.BlockSpec((fin, block_m), lambda i: (0, i)),   # x tile over batch (lanes)
            full(w1c0), full(w1c1), full(b1),
            full(w2t), full(b2),
            full(w3t), full(b3),
            full(w4c), full(b4),
        ],
        out_specs=pl.BlockSpec((1, block_m), lambda i: (0, i)),      # lane-dense output
        compiler_params=pltpu.CompilerParams(
            dimension_semantics=("parallel",),
            vmem_limit_bytes=32 * 1024 * 1024),
    )(xt, w1c0, w1c1, b1, w2t, b2, w3t, b3, w4c, b4)

    return out[0, :B].reshape(B, 1)


def init_params(key):
    """Deterministic init mimicking PyTorch Linear default (uniform ±1/sqrt(fan_in)).

    Kernel layout:
      w1c0, w1c1 : [128, 1]   fc1 weight columns (for the VPU outer product)
      b{i}       : [out, 1]   column vectors (broadcast over lanes)
      w2t, w3t   : [out, in]  (PyTorch weight layout; cast to bf16 at call time)
      w4c        : [8, 1]     fc4 weight as a column for the VPU reduction
    """
    dims = [(2, 128), (128, 64), (64, 8), (8, 1)]
    params = {}
    for idx, (fan_in, fan_out) in enumerate(dims, start=1):
        key, kw, kb = jax.random.split(key, 3)
        bound = 1.0 / jnp.sqrt(fan_in)
        params[f"w{idx}t"] = jax.random.uniform(
            kw, (fan_out, fan_in), jnp.float32, -bound, bound)
        params[f"b{idx}"] = jax.random.uniform(
            kb, (fan_out, 1), jnp.float32, -bound, bound)
    w1t = params.pop("w1t")                            # [128, 2]
    params["w1c0"] = w1t[:, 0:1]
    params["w1c1"] = w1t[:, 1:2]
    params["w4c"] = params.pop("w4t").T                # [1,8] -> [8,1]
    return params


def backbone_reference(x, p):
    """Plain-JAX reference in standard row-major math (f32)."""
    w1t = jnp.concatenate([p["w1c0"], p["w1c1"]], axis=1)   # [128, 2]
    h = jnp.maximum(x @ w1t.T + p["b1"].T, 0.0)
    h = jnp.maximum(h @ p["w2t"].T + p["b2"].T, 0.0)
    h = jnp.maximum(h @ p["w3t"].T + p["b3"].T, 0.0)
    return h @ p["w4c"] + p["b4"].T


if __name__ == "__main__":
    key = jax.random.PRNGKey(0)
    key, kx = jax.random.split(key)

    B = 16                                             # small demo batch
    x = jax.random.normal(kx, (B, 2), jnp.float32)     # fc1 expects 2 input features

    params = init_params(key)

    out = jax.block_until_ready(backbone_forward(x, params))

    ref = backbone_reference(x, params)
    assert out.shape == (B, 1)
    # bf16 at the MXU boundary (matches TPU default-precision f32 matmul class);
    # tolerance reflects the bf16 mantissa, not a semantic difference.
    assert jnp.allclose(out, ref, atol=2e-2, rtol=2e-2), \
        float(jnp.max(jnp.abs(out - ref)))

    print("KERNEL_OK")
</pallas_src>

<mosaic_0001>
module attributes {stable_mosaic.version = 11 : i64} {
  func.func @mlp_kernel(%arg0: i32, %arg1: memref<2x128xf32, #tpu.memory_space<vmem>>, %arg2: memref<128x1xf32, #tpu.memory_space<vmem>>, %arg3: memref<128x1xf32, #tpu.memory_space<vmem>>, %arg4: memref<128x1xf32, #tpu.memory_space<vmem>>, %arg5: memref<64x128xbf16, #tpu.memory_space<vmem>>, %arg6: memref<64x1xf32, #tpu.memory_space<vmem>>, %arg7: memref<8x64xbf16, #tpu.memory_space<vmem>>, %arg8: memref<8x1xf32, #tpu.memory_space<vmem>>, %arg9: memref<8x1xf32, #tpu.memory_space<vmem>>, %arg10: memref<1x1xf32, #tpu.memory_space<vmem>>, %arg11: memref<1x128xf32, #tpu.memory_space<vmem>>) attributes {dimension_semantics = [#tpu.dimension_semantics<parallel>], iteration_bounds = array<i64: 1>, scalar_prefetch = 0 : i64, scratch_operands = 0 : i64, tpu.core_type = #tpu.core_type<tc>, window_params = [{transform_indices = @transform_0, window_bounds = array<i64: 2, 128>}, {pipeline_mode = #tpu.pipeline_mode<synchronous>, transform_indices = @transform_1, window_bounds = array<i64: 128, 1>}, {pipeline_mode = #tpu.pipeline_mode<synchronous>, transform_indices = @transform_2, window_bounds = array<i64: 128, 1>}, {pipeline_mode = #tpu.pipeline_mode<synchronous>, transform_indices = @transform_3, window_bounds = array<i64: 128, 1>}, {pipeline_mode = #tpu.pipeline_mode<synchronous>, transform_indices = @transform_4, window_bounds = array<i64: 64, 128>}, {pipeline_mode = #tpu.pipeline_mode<synchronous>, transform_indices = @transform_5, window_bounds = array<i64: 64, 1>}, {pipeline_mode = #tpu.pipeline_mode<synchronous>, transform_indices = @transform_6, window_bounds = array<i64: 8, 64>}, {pipeline_mode = #tpu.pipeline_mode<synchronous>, transform_indices = @transform_7, window_bounds = array<i64: 8, 1>}, {pipeline_mode = #tpu.pipeline_mode<synchronous>, transform_indices = @transform_8, window_bounds = array<i64: 8, 1>}, {pipeline_mode = #tpu.pipeline_mode<synchronous>, transform_indices = @transform_9, window_bounds = array<i64: 1, 1>}, {transform_indices = @transform_10, window_bounds = array<i64: 1, 128>}]} {
    %c0 = arith.constant 0 : index
    %c0_0 = arith.constant 0 : index
    %0 = vector.load %arg1[%c0, %c0_0] : memref<2x128xf32, #tpu.memory_space<vmem>>, vector<2x128xf32>
    %c0_1 = arith.constant 0 : index
    %c0_2 = arith.constant 0 : index
    %1 = vector.load %arg2[%c0_1, %c0_2] : memref<128x1xf32, #tpu.memory_space<vmem>>, vector<128x1xf32>
    %2 = vector.extract_strided_slice %0 {offsets = [0, 0], sizes = [1, 128], strides = [1, 1]} : vector<2x128xf32> to vector<1x128xf32>
    %3 = vector.broadcast %1 : vector<128x1xf32> to vector<128x128xf32>
    %4 = vector.broadcast %2 : vector<1x128xf32> to vector<128x128xf32>
    %5 = arith.mulf %3, %4 : vector<128x128xf32>
    %c0_3 = arith.constant 0 : index
    %c0_4 = arith.constant 0 : index
    %6 = vector.load %arg3[%c0_3, %c0_4] : memref<128x1xf32, #tpu.memory_space<vmem>>, vector<128x1xf32>
    %7 = vector.extract_strided_slice %0 {offsets = [1, 0], sizes = [1, 128], strides = [1, 1]} : vector<2x128xf32> to vector<1x128xf32>
    %8 = vector.broadcast %6 : vector<128x1xf32> to vector<128x128xf32>
    %9 = vector.broadcast %7 : vector<1x128xf32> to vector<128x128xf32>
    %10 = arith.mulf %8, %9 : vector<128x128xf32>
    %11 = arith.addf %5, %10 : vector<128x128xf32>
    %c0_5 = arith.constant 0 : index
    %c0_6 = arith.constant 0 : index
    %12 = vector.load %arg4[%c0_5, %c0_6] : memref<128x1xf32, #tpu.memory_space<vmem>>, vector<128x1xf32>
    %13 = vector.broadcast %12 : vector<128x1xf32> to vector<128x128xf32>
    %14 = arith.addf %11, %13 : vector<128x128xf32>
    %cst = arith.constant 0.000000e+00 : f32
    %15 = vector.broadcast %cst : f32 to vector<128x128xf32>
    %16 = arith.maximumf %14, %15 : vector<128x128xf32>
    %c0_7 = arith.constant 0 : index
    %c0_8 = arith.constant 0 : index
    %17 = vector.load %arg5[%c0_7, %c0_8] : memref<64x128xbf16, #tpu.memory_space<vmem>>, vector<64x128xbf16>
    %18 = arith.truncf %16 : vector<128x128xf32> to vector<128x128xbf16>
    %cst_9 = arith.constant dense<0.000000e+00> : vector<64x128xf32>
    %19 = tpu.matmul %17, %18, %cst_9 {dimension_numbers = #tpu.dot_dimension_numbers<[1], [0], [0], [1], [0, 0, 1, 1], [], []>} : vector<64x128xbf16>, vector<128x128xbf16>, vector<64x128xf32> -> vector<64x128xf32>
    %c0_10 = arith.constant 0 : index
    %c0_11 = arith.constant 0 : index
    %20 = vector.load %arg6[%c0_10, %c0_11] : memref<64x1xf32, #tpu.memory_space<vmem>>, vector<64x1xf32>
    %21 = vector.broadcast %20 : vector<64x1xf32> to vector<64x128xf32>
    %22 = arith.addf %19, %21 : vector<64x128xf32>
    %cst_12 = arith.constant 0.000000e+00 : f32
    %23 = vector.broadcast %cst_12 : f32 to vector<64x128xf32>
    %24 = arith.maximumf %22, %23 : vector<64x128xf32>
    %c0_13 = arith.constant 0 : index
    %c0_14 = arith.constant 0 : index
    %25 = vector.load %arg7[%c0_13, %c0_14] : memref<8x64xbf16, #tpu.memory_space<vmem>>, vector<8x64xbf16>
    %26 = arith.truncf %24 : vector<64x128xf32> to vector<64x128xbf16>
    %cst_15 = arith.constant dense<0.000000e+00> : vector<8x128xf32>
    %27 = tpu.matmul %25, %26, %cst_15 {dimension_numbers = #tpu.dot_dimension_numbers<[1], [0], [0], [1], [0, 0, 1, 1], [], []>} : vector<8x64xbf16>, vector<64x128xbf16>, vector<8x128xf32> -> vector<8x128xf32>
    %c0_16 = arith.constant 0 : index
    %c0_17 = arith.constant 0 : index
    %28 = vector.load %arg8[%c0_16, %c0_17] : memref<8x1xf32, #tpu.memory_space<vmem>>, vector<8x1xf32>
    %29 = vector.broadcast %28 : vector<8x1xf32> to vector<8x128xf32>
    %30 = arith.addf %27, %29 : vector<8x128xf32>
    %cst_18 = arith.constant 0.000000e+00 : f32
    %31 = vector.broadcast %cst_18 : f32 to vector<8x128xf32>
    %32 = arith.maximumf %30, %31 : vector<8x128xf32>
    %c0_19 = arith.constant 0 : index
    %c0_20 = arith.constant 0 : index
    %33 = vector.load %arg9[%c0_19, %c0_20] : memref<8x1xf32, #tpu.memory_space<vmem>>, vector<8x1xf32>
    %34 = vector.broadcast %33 : vector<8x1xf32> to vector<8x128xf32>
    %35 = arith.mulf %32, %34 : vector<8x128xf32>
    %cst_21 = arith.constant dense<0.000000e+00> : vector<128xf32>
    %36 = vector.multi_reduction <add>, %35, %cst_21 [0] : vector<8x128xf32> to vector<128xf32>
    %37 = vector.shape_cast %36 : vector<128xf32> to vector<1x128xf32>
    %c0_22 = arith.constant 0 : index
    %c0_23 = arith.constant 0 : index
    %38 = vector.load %arg10[%c0_22, %c0_23] : memref<1x1xf32, #tpu.memory_space<vmem>>, vector<1x1xf32>
    %39 = vector.broadcast %38 : vector<1x1xf32> to vector<1x128xf32>
    %40 = arith.addf %37, %39 : vector<1x128xf32>
    %c0_24 = arith.constant 0 : index
    %c0_25 = arith.constant 0 : index
    %41 = vector.load %arg11[%c0_24, %c0_25] : memref<1x128xf32, #tpu.memory_space<vmem>>, vector<1x128xf32>
    tpu.vector_store %arg11[%c0_24, %c0_25], %40 {strides = array<i32>} : memref<1x128xf32, #tpu.memory_space<vmem>>, vector<1x128xf32>,
    return
  }
  func.func @transform_0(%arg0: i32) -> (i32, i32) {
    %c0_i32 = arith.constant 0 : i32
    %c0_i32_0 = arith.constant 0 : i32
    return %c0_i32, %arg0 : i32, i32
  }
  func.func @transform_1(%arg0: i32) -> (i32, i32) {
    %c0_i32 = arith.constant 0 : i32
    %c0_i32_0 = arith.constant 0 : i32
    %c0_i32_1 = arith.constant 0 : i32
    return %c0_i32, %c0_i32_0 : i32, i32
  }
  func.func @transform_2(%arg0: i32) -> (i32, i32) {
    %c0_i32 = arith.constant 0 : i32
    %c0_i32_0 = arith.constant 0 : i32
    %c0_i32_1 = arith.constant 0 : i32
    return %c0_i32, %c0_i32_0 : i32, i32
  }
  func.func @transform_3(%arg0: i32) -> (i32, i32) {
    %c0_i32 = arith.constant 0 : i32
    %c0_i32_0 = arith.constant 0 : i32
    %c0_i32_1 = arith.constant 0 : i32
    return %c0_i32, %c0_i32_0 : i32, i32
  }
  func.func @transform_4(%arg0: i32) -> (i32, i32) {
    %c0_i32 = arith.constant 0 : i32
    %c0_i32_0 = arith.constant 0 : i32
    %c0_i32_1 = arith.constant 0 : i32
    return %c0_i32, %c0_i32_0 : i32, i32
  }
  func.func @transform_5(%arg0: i32) -> (i32, i32) {
    %c0_i32 = arith.constant 0 : i32
    %c0_i32_0 = arith.constant 0 : i32
    %c0_i32_1 = arith.constant 0 : i32
    return %c0_i32, %c0_i32_0 : i32, i32
  }
  func.func @transform_6(%arg0: i32) -> (i32, i32) {
    %c0_i32 = arith.constant 0 : i32
    %c0_i32_0 = arith.constant 0 : i32
    %c0_i32_1 = arith.constant 0 : i32
    return %c0_i32, %c0_i32_0 : i32, i32
  }
  func.func @transform_7(%arg0: i32) -> (i32, i32) {
    %c0_i32 = arith.constant 0 : i32
    %c0_i32_0 = arith.constant 0 : i32
    %c0_i32_1 = arith.constant 0 : i32
    return %c0_i32, %c0_i32_0 : i32, i32
  }
  func.func @transform_8(%arg0: i32) -> (i32, i32) {
    %c0_i32 = arith.constant 0 : i32
    %c0_i32_0 = arith.constant 0 : i32
    %c0_i32_1 = arith.constant 0 : i32
    return %c0_i32, %c0_i32_0 : i32, i32
  }
  func.func @transform_9(%arg0: i32) -> (i32, i32) {
    %c0_i32 = arith.constant 0 : i32
    %c0_i32_0 = arith.constant 0 : i32
    %c0_i32_1 = arith.constant 0 : i32
    return %c0_i32, %c0_i32_0 : i32, i32
  }
  func.func @transform_10(%arg0: i32) -> (i32, i32) {
    %c0_i32 = arith.constant 0 : i32
    %c0_i32_0 = arith.constant 0 : i32
    return %c0_i32, %arg0 : i32, i32
  }
}

</mosaic_0001>

<llo_original>
// kernel: tpu_custom_call.1
$region0: #{tpu_custom_call.1}
  #allocation0 [shape = 'u32[]', space=smem, size = 0x4, offset = 0x4, fixed_abs, tag = 'smem constant byte address 0x4 - core index']
  #allocation1 [shape = 'u32[144,128]{1,0:T(1,128)}', space=vmem, size = 0x12000, scoped, tag = 'internal scratch']
  #allocation2 [shape = 'f32[1,1]{1,0:T(1,128)S(1)}', space=vmem, size = 0x200, scoped, tag = 'scoped memory for tpu_custom_call.1']
  %s0 = inlined_call_operand.vmem [shape: f32[2,128], index: 0, kind: input, shape index: {}]
  %s1 = inlined_call_operand.vmem [shape: f32[128,1], index: 1, kind: input, shape index: {}]
  %s2 = inlined_call_operand.vmem [shape: f32[128,1], index: 2, kind: input, shape index: {}]
  %s3 = inlined_call_operand.vmem [shape: f32[128,1], index: 3, kind: input, shape index: {}]
  %s4 = inlined_call_operand.vmem [shape: bf16[64,128], index: 4, kind: input, shape index: {}]
  %s5 = inlined_call_operand.vmem [shape: f32[64,1], index: 5, kind: input, shape index: {}]
  %s6 = inlined_call_operand.vmem [shape: bf16[8,64], index: 6, kind: input, shape index: {}]
  %s7 = inlined_call_operand.vmem [shape: f32[8,1], index: 7, kind: input, shape index: {}]
  %s8 = inlined_call_operand.vmem [shape: f32[8,1], index: 8, kind: input, shape index: {}]
  %s9 = inlined_call_operand.<no memory space> [shape: f32[1,1], index: 9, kind: input, shape index: {}]
  %s10 = inlined_call_operand.hbm [shape: f32[1,128], index: 10, kind: output, shape index: {}]
  %s11 = sld [smem:[#allocation0]]
  $region50: #{tpu_custom_call.1} parent=0
    _
  %s13 = ssub.s32 1, %s11
  %s14 = scalar_select 0, %s13, %s11
  %v15 = vstv %s9
  %16 = vst [vmem:[#allocation2] sm:$0x1] %v15
  $region1: #{tpu_custom_call.1} parent=0
    #allocation3 [shape = 'u8[512]{0}', space=vmem, size = 0x400, scoped, tag = 'output window, operand 0, single buffered']
    #allocation4 [shape = 's32[1]{0}', space=sflag, size = 0x4, scoped, tag = 'scoped memory for tpu_custom_call.1']
    %17 = vsyncpa [#allocation4], 0
    // Predicated region
    $region2: #{tpu_custom_call.1} parent=1 // pred_check
      _
    $region3: #{tpu_custom_call.1} parent=1 // pred_check_branch
      %19 = sbr.rel (0) target = $region5
    $region4: #{tpu_custom_call.1} parent=1 // pred_region
      _
    $region5: #{tpu_custom_call.1} parent=1 // pred_fallthru
      _
    // Predicated region
    $region6: #{tpu_custom_call.1} parent=1 // pred_check
      _
    $region7: #{tpu_custom_call.1} parent=1 // pred_check_branch
      %21 = sbr.rel (0) target = $region9
    $region8: #{tpu_custom_call.1} parent=1 // pred_region
      _
    $region9: #{tpu_custom_call.1} parent=1 // pred_fallthru
      _
    // Predicated region
    $region10: #{tpu_custom_call.1} parent=1 // pred_check
      _
    $region11: #{tpu_custom_call.1} parent=1 // pred_check_branch
      %23 = sbr.rel (0) target = $region13
    $region12: #{tpu_custom_call.1} parent=1 // pred_region
      _
    $region13: #{tpu_custom_call.1} parent=1 // pred_fallthru
      _
    // Predicated region
    $region14: #{tpu_custom_call.1} parent=1 // pred_check
      _
    $region15: #{tpu_custom_call.1} parent=1 // pred_check_branch
      %25 = sbr.rel (0) target = $region17
    $region16: #{tpu_custom_call.1} parent=1 // pred_region
      _
    $region17: #{tpu_custom_call.1} parent=1 // pred_fallthru
      _
    // Predicated region
    $region18: #{tpu_custom_call.1} parent=1 // pred_check
      _
    $region19: #{tpu_custom_call.1} parent=1 // pred_check_branch
      %27 = sbr.rel (0) target = $region21
    $region20: #{tpu_custom_call.1} parent=1 // pred_region
      _
    $region21: #{tpu_custom_call.1} parent=1 // pred_fallthru
      _
    // Predicated region
    $region22: #{tpu_custom_call.1} parent=1 // pred_check
      _
    $region23: #{tpu_custom_call.1} parent=1 // pred_check_branch
      %29 = sbr.rel (0) target = $region25
    $region24: #{tpu_custom_call.1} parent=1 // pred_region
      _
    $region25: #{tpu_custom_call.1} parent=1 // pred_fallthru
      _
    // Predicated region
    $region26: #{tpu_custom_call.1} parent=1 // pred_check
      _
    $region27: #{tpu_custom_call.1} parent=1 // pred_check_branch
      %31 = sbr.rel (0) target = $region29
    $region28: #{tpu_custom_call.1} parent=1 // pred_region
      _
    $region29: #{tpu_custom_call.1} parent=1 // pred_fallthru
      _
    // Predicated region
    $region30: #{tpu_custom_call.1} parent=1 // pred_check
      _
    $region31: #{tpu_custom_call.1} parent=1 // pred_check_branch
      %33 = sbr.rel (0) target = $region33
    $region32: #{tpu_custom_call.1} parent=1 // pred_region
      _
    $region33: #{tpu_custom_call.1} parent=1 // pred_fallthru
      _
    // Predicated region
    $region34: #{tpu_custom_call.1} parent=1 // pred_check
      _
    $region35: #{tpu_custom_call.1} parent=1 // pred_check_branch
      %35 = sbr.rel (0) target = $region37
    $region36: #{tpu_custom_call.1} parent=1 // pred_region
      _
    $region37: #{tpu_custom_call.1} parent=1 // pred_fallthru
      _
    // Predicated region
    $region38: #{tpu_custom_call.1} parent=1 // pred_check
      _
    $region39: #{tpu_custom_call.1} parent=1 // pred_check_branch
      %37 = sbr.rel (0) target = $region41
    $region40: #{tpu_custom_call.1} parent=1 // pred_region
      _
    $region41: #{tpu_custom_call.1} parent=1 // pred_fallthru
      _
    %v39 = vld [vmem:[%s0] sm:$0x3]
    %v40 = vld [vmem:[%s1] sm:$0xff]
    %v41 = vld [vmem:[%s1 + $0x8] sm:$0xff]
    %v42 = vld [vmem:[%s1 + $0x10] sm:$0xff]
    %v43 = vld [vmem:[%s1 + $0x18] sm:$0xff]
    %v44 = vld [vmem:[%s1 + $0x20] sm:$0xff]
    %v45 = vld [vmem:[%s1 + $0x28] sm:$0xff]
    %v46 = vld [vmem:[%s1 + $0x30] sm:$0xff]
    %v47 = vld [vmem:[%s1 + $0x38] sm:$0xff]
    %v48 = vld [vmem:[%s1 + $0x40] sm:$0xff]
    %v49 = vld [vmem:[%s1 + $0x48] sm:$0xff]
    %v50 = vld [vmem:[%s1 + $0x50] sm:$0xff]
    %v51 = vld [vmem:[%s1 + $0x58] sm:$0xff]
    %v52 = vld [vmem:[%s1 + $0x60] sm:$0xff]
    %v53 = vld [vmem:[%s1 + $0x68] sm:$0xff]
    %v54 = vld [vmem:[%s1 + $0x70] sm:$0xff]
    %v55 = vld [vmem:[%s1 + $0x78] sm:$0xff]
    %57 = vset.pattern.permute.xlu0 0
    %58 = vperm.xlu0 %57, %v40
    %v59 = vpop.permute.xlu0 %58
    %62 = vset.pattern.permute.xlu0 0
    %63 = vperm.xlu0 %62, %v41
    %v64 = vpop.permute.xlu0 %63
    %67 = vset.pattern.permute.xlu0 0
    %68 = vperm.xlu0 %67, %v42
    %v69 = vpop.permute.xlu0 %68
    %72 = vset.pattern.permute.xlu0 0
    %73 = vperm.xlu0 %72, %v43
    %v74 = vpop.permute.xlu0 %73
    %77 = vset.pattern.permute.xlu0 0
    %78 = vperm.xlu0 %77, %v44
    %v79 = vpop.permute.xlu0 %78
    %82 = vset.pattern.permute.xlu0 0
    %83 = vperm.xlu0 %82, %v45
    %v84 = vpop.permute.xlu0 %83
    %87 = vset.pattern.permute.xlu0 0
    %88 = vperm.xlu0 %87, %v46
    %v89 = vpop.permute.xlu0 %88
    %92 = vset.pattern.permute.xlu0 0
    %93 = vperm.xlu0 %92, %v47
    %v94 = vpop.permute.xlu0 %93
    %97 = vset.pattern.permute.xlu0 0
    %98 = vperm.xlu0 %97, %v48
    %v99 = vpop.permute.xlu0 %98
    %102 = vset.pattern.permute.xlu0 0
    %103 = vperm.xlu0 %102, %v49
    %v104 = vpop.permute.xlu0 %103
    %107 = vset.pattern.permute.xlu0 0
    %108 = vperm.xlu0 %107, %v50
    %v109 = vpop.permute.xlu0 %108
    %112 = vset.pattern.permute.xlu0 0
    %113 = vperm.xlu0 %112, %v51
    %v114 = vpop.permute.xlu0 %113
    %117 = vset.pattern.permute.xlu0 0
    %118 = vperm.xlu0 %117, %v52
    %v119 = vpop.permute.xlu0 %118
    %122 = vset.pattern.permute.xlu0 0
    %123 = vperm.xlu0 %122, %v53
    %v124 = vpop.permute.xlu0 %123
    %127 = vset.pattern.permute.xlu0 0
    %128 = vperm.xlu0 %127, %v54
    %v129 = vpop.permute.xlu0 %128
    %132 = vset.pattern.permute.xlu0 0
    %133 = vperm.xlu0 %132, %v55
    %v134 = vpop.permute.xlu0 %133
    %v136 = vlaneseq
    %v137 = vshrl.u32 %v136, 7
    %v138 = vsub.s32 0, %v137
    %v139 = vrot.slane %v39, %v138
    %v140 = vmul.f32 %v59, %v139
    %v141 = vmul.f32 %v64, %v139
    %v142 = vmul.f32 %v69, %v139
    %v143 = vmul.f32 %v74, %v139
    %v144 = vmul.f32 %v79, %v139
    %v145 = vmul.f32 %v84, %v139
    %v146 = vmul.f32 %v89, %v139
    %v147 = vmul.f32 %v94, %v139
    %v148 = vmul.f32 %v99, %v139
    %v149 = vmul.f32 %v104, %v139
    %v150 = vmul.f32 %v109, %v139
    %v151 = vmul.f32 %v114, %v139
    %v152 = vmul.f32 %v119, %v139
    %v153 = vmul.f32 %v124, %v139
    %v154 = vmul.f32 %v129, %v139
    %v155 = vmul.f32 %v134, %v139
    %v156 = vld [vmem:[%s2] sm:$0xff]
    %v157 = vld [vmem:[%s2 + $0x8] sm:$0xff]
    %v158 = vld [vmem:[%s2 + $0x10] sm:$0xff]
    %v159 = vld [vmem:[%s2 + $0x18] sm:$0xff]
    %v160 = vld [vmem:[%s2 + $0x20] sm:$0xff]
    %v161 = vld [vmem:[%s2 + $0x28] sm:$0xff]
    %v162 = vld [vmem:[%s2 + $0x30] sm:$0xff]
    %v163 = vld [vmem:[%s2 + $0x38] sm:$0xff]
    %v164 = vld [vmem:[%s2 + $0x40] sm:$0xff]
    %v165 = vld [vmem:[%s2 + $0x48] sm:$0xff]
    %v166 = vld [vmem:[%s2 + $0x50] sm:$0xff]
    %v167 = vld [vmem:[%s2 + $0x58] sm:$0xff]
    %v168 = vld [vmem:[%s2 + $0x60] sm:$0xff]
    %v169 = vld [vmem:[%s2 + $0x68] sm:$0xff]
    %v170 = vld [vmem:[%s2 + $0x70] sm:$0xff]
    %v171 = vld [vmem:[%s2 + $0x78] sm:$0xff]
    %173 = vset.pattern.permute.xlu0 0
    %174 = vperm.xlu0 %173, %v156
    %v175 = vpop.permute.xlu0 %174
    %178 = vset.pattern.permute.xlu0 0
    %179 = vperm.xlu0 %178, %v157
    %v180 = vpop.permute.xlu0 %179
    %183 = vset.pattern.permute.xlu0 0
    %184 = vperm.xlu0 %183, %v158
    %v185 = vpop.permute.xlu0 %184
    %188 = vset.pattern.permute.xlu0 0
    %189 = vperm.xlu0 %188, %v159
    %v190 = vpop.permute.xlu0 %189
    %193 = vset.pattern.permute.xlu0 0
    %194 = vperm.xlu0 %193, %v160
    %v195 = vpop.permute.xlu0 %194
    %198 = vset.pattern.permute.xlu0 0
    %199 = vperm.xlu0 %198, %v161
    %v200 = vpop.permute.xlu0 %199
    %203 = vset.pattern.permute.xlu0 0
    %204 = vperm.xlu0 %203, %v162
    %v205 = vpop.permute.xlu0 %204
    %208 = vset.pattern.permute.xlu0 0
    %209 = vperm.xlu0 %208, %v163
    %v210 = vpop.permute.xlu0 %209
    %213 = vset.pattern.permute.xlu0 0
    %214 = vperm.xlu0 %213, %v164
    %v215 = vpop.permute.xlu0 %214
    %218 = vset.pattern.permute.xlu0 0
    %219 = vperm.xlu0 %218, %v165
    %v220 = vpop.permute.xlu0 %219
    %223 = vset.pattern.permute.xlu0 0
    %224 = vperm.xlu0 %223, %v166
    %v225 = vpop.permute.xlu0 %224
    %228 = vset.pattern.permute.xlu0 0
    %229 = vperm.xlu0 %228, %v167
    %v230 = vpop.permute.xlu0 %229
    %233 = vset.pattern.permute.xlu0 0
    %234 = vperm.xlu0 %233, %v168
    %v235 = vpop.permute.xlu0 %234
    %238 = vset.pattern.permute.xlu0 0
    %239 = vperm.xlu0 %238, %v169
    %v240 = vpop.permute.xlu0 %239
    %243 = vset.pattern.permute.xlu0 0
    %244 = vperm.xlu0 %243, %v170
    %v245 = vpop.permute.xlu0 %244
    %248 = vset.pattern.permute.xlu0 0
    %249 = vperm.xlu0 %248, %v171
    %v250 = vpop.permute.xlu0 %249
    %v252 = vlaneseq
    %v253 = vshrl.u32 %v252, 7
    %v254 = vsub.s32 1, %v253
    %v255 = vrot.slane %v39, %v254
    %v256 = vmul.f32 %v175, %v255
    %v257 = vmul.f32 %v180, %v255
    %v258 = vmul.f32 %v185, %v255
    %v259 = vmul.f32 %v190, %v255
    %v260 = vmul.f32 %v195, %v255
    %v261 = vmul.f32 %v200, %v255
    %v262 = vmul.f32 %v205, %v255
    %v263 = vmul.f32 %v210, %v255
    %v264 = vmul.f32 %v215, %v255
    %v265 = vmul.f32 %v220, %v255
    %v266 = vmul.f32 %v225, %v255
    %v267 = vmul.f32 %v230, %v255
    %v268 = vmul.f32 %v235, %v255
    %v269 = vmul.f32 %v240, %v255
    %v270 = vmul.f32 %v245, %v255
    %v271 = vmul.f32 %v250, %v255
    %v272 = vadd.f32 %v140, %v256
    %v273 = vadd.f32 %v141, %v257
    %v274 = vadd.f32 %v142, %v258
    %v275 = vadd.f32 %v143, %v259
    %v276 = vadd.f32 %v144, %v260
    %v277 = vadd.f32 %v145, %v261
    %v278 = vadd.f32 %v146, %v262
    %v279 = vadd.f32 %v147, %v263
    %v280 = vadd.f32 %v148, %v264
    %v281 = vadd.f32 %v149, %v265
    %v282 = vadd.f32 %v150, %v266
    %v283 = vadd.f32 %v151, %v267
    %v284 = vadd.f32 %v152, %v268
    %v285 = vadd.f32 %v153, %v269
    %v286 = vadd.f32 %v154, %v270
    %v287 = vadd.f32 %v155, %v271
    %v288 = vld [vmem:[%s3] sm:$0xff]
    %v289 = vld [vmem:[%s3 + $0x8] sm:$0xff]
    %v290 = vld [vmem:[%s3 + $0x10] sm:$0xff]
    %v291 = vld [vmem:[%s3 + $0x18] sm:$0xff]
    %v292 = vld [vmem:[%s3 + $0x20] sm:$0xff]
    %v293 = vld [vmem:[%s3 + $0x28] sm:$0xff]
    %v294 = vld [vmem:[%s3 + $0x30] sm:$0xff]
    %v295 = vld [vmem:[%s3 + $0x38] sm:$0xff]
    %v296 = vld [vmem:[%s3 + $0x40] sm:$0xff]
    %v297 = vld [vmem:[%s3 + $0x48] sm:$0xff]
    %v298 = vld [vmem:[%s3 + $0x50] sm:$0xff]
    %v299 = vld [vmem:[%s3 + $0x58] sm:$0xff]
    %v300 = vld [vmem:[%s3 + $0x60] sm:$0xff]
    %v301 = vld [vmem:[%s3 + $0x68] sm:$0xff]
    %v302 = vld [vmem:[%s3 + $0x70] sm:$0xff]
    %v303 = vld [vmem:[%s3 + $0x78] sm:$0xff]
    %305 = vset.pattern.permute.xlu0 0
    %306 = vperm.xlu0 %305, %v288
    %v307 = vpop.permute.xlu0 %306
    %310 = vset.pattern.permute.xlu0 0
    %311 = vperm.xlu0 %310, %v289
    %v312 = vpop.permute.xlu0 %311
    %315 = vset.pattern.permute.xlu0 0
    %316 = vperm.xlu0 %315, %v290
    %v317 = vpop.permute.xlu0 %316
    %320 = vset.pattern.permute.xlu0 0
    %321 = vperm.xlu0 %320, %v291
    %v322 = vpop.permute.xlu0 %321
    %325 = vset.pattern.permute.xlu0 0
    %326 = vperm.xlu0 %325, %v292
    %v327 = vpop.permute.xlu0 %326
    %330 = vset.pattern.permute.xlu0 0
    %331 = vperm.xlu0 %330, %v293
    %v332 = vpop.permute.xlu0 %331
    %335 = vset.pattern.permute.xlu0 0
    %336 = vperm.xlu0 %335, %v294
    %v337 = vpop.permute.xlu0 %336
    %340 = vset.pattern.permute.xlu0 0
    %341 = vperm.xlu0 %340, %v295
    %v342 = vpop.permute.xlu0 %341
    %345 = vset.pattern.permute.xlu0 0
    %346 = vperm.xlu0 %345, %v296
    %v347 = vpop.permute.xlu0 %346
    %350 = vset.pattern.permute.xlu0 0
    %351 = vperm.xlu0 %350, %v297
    %v352 = vpop.permute.xlu0 %351
    %355 = vset.pattern.permute.xlu0 0
    %356 = vperm.xlu0 %355, %v298
    %v357 = vpop.permute.xlu0 %356
    %360 = vset.pattern.permute.xlu0 0
    %361 = vperm.xlu0 %360, %v299
    %v362 = vpop.permute.xlu0 %361
    %365 = vset.pattern.permute.xlu0 0
    %366 = vperm.xlu0 %365, %v300
    %v367 = vpop.permute.xlu0 %366
    %370 = vset.pattern.permute.xlu0 0
    %371 = vperm.xlu0 %370, %v301
    %v372 = vpop.permute.xlu0 %371
    %375 = vset.pattern.permute.xlu0 0
    %376 = vperm.xlu0 %375, %v302
    %v377 = vpop.permute.xlu0 %376
    %380 = vset.pattern.permute.xlu0 0
    %381 = vperm.xlu0 %380, %v303
    %v382 = vpop.permute.xlu0 %381
    %v384 = vadd.f32 %v272, %v307
    %v385 = vadd.f32 %v273, %v312
    %v386 = vadd.f32 %v274, %v317
    %v387 = vadd.f32 %v275, %v322
    %v388 = vadd.f32 %v276, %v327
    %v389 = vadd.f32 %v277, %v332
    %v390 = vadd.f32 %v278, %v337
    %v391 = vadd.f32 %v279, %v342
    %v392 = vadd.f32 %v280, %v347
    %v393 = vadd.f32 %v281, %v352
    %v394 = vadd.f32 %v282, %v357
    %v395 = vadd.f32 %v283, %v362
    %v396 = vadd.f32 %v284, %v367
    %v397 = vadd.f32 %v285, %v372
    %v398 = vadd.f32 %v286, %v377
    %v399 = vadd.f32 %v287, %v382
    %v400 = vmax.f32 %v384, 0.0
    %v401 = vmax.f32 %v385, 0.0
    %v402 = vmax.f32 %v386, 0.0
    %v403 = vmax.f32 %v387, 0.0
    %v404 = vmax.f32 %v388, 0.0
    %v405 = vmax.f32 %v389, 0.0
    %v406 = vmax.f32 %v390, 0.0
    %v407 = vmax.f32 %v391, 0.0
    %v408 = vmax.f32 %v392, 0.0
    %v409 = vmax.f32 %v393, 0.0
    %v410 = vmax.f32 %v394, 0.0
    %v411 = vmax.f32 %v395, 0.0
    %v412 = vmax.f32 %v396, 0.0
    %v413 = vmax.f32 %v397, 0.0
    %v414 = vmax.f32 %v398, 0.0
    %v415 = vmax.f32 %v399, 0.0
    %v416 = vld [vmem:[%s4] sm:$0xf]
    %v417 = vld [vmem:[%s4 + $0x4] sm:$0xf]
    %v418 = vld [vmem:[%s4 + $0x8] sm:$0xf]
    %v419 = vld [vmem:[%s4 + $0xc] sm:$0xf]
    %v420 = vld [vmem:[%s4 + $0x10] sm:$0xf]
    %v421 = vld [vmem:[%s4 + $0x14] sm:$0xf]
    %v422 = vld [vmem:[%s4 + $0x18] sm:$0xf]
    %v423 = vld [vmem:[%s4 + $0x1c] sm:$0xf]
    %v424 = vpack.c.bf16 %v401, %v400
    %v425 = vpack.c.bf16 %v403, %v402
    %v426 = vpack.c.bf16 %v405, %v404
    %v427 = vpack.c.bf16 %v407, %v406
    %v428 = vpack.c.bf16 %v409, %v408
    %v429 = vpack.c.bf16 %v411, %v410
    %v430 = vpack.c.bf16 %v413, %v412
    %v431 = vpack.c.bf16 %v415, %v414
    %v432 = vld [vmem:[%s5] sm:$0xff]
    %v433 = vld [vmem:[%s5 + $0x8] sm:$0xff]
    %v434 = vld [vmem:[%s5 + $0x10] sm:$0xff]
    %v435 = vld [vmem:[%s5 + $0x18] sm:$0xff]
    %v436 = vld [vmem:[%s5 + $0x20] sm:$0xff]
    %v437 = vld [vmem:[%s5 + $0x28] sm:$0xff]
    %v438 = vld [vmem:[%s5 + $0x30] sm:$0xff]
    %v439 = vld [vmem:[%s5 + $0x38] sm:$0xff]
    %441 = vset.pattern.permute.xlu0 0
    %442 = vperm.xlu0 %441, %v432
    %v443 = vpop.permute.xlu0 %442
    %446 = vset.pattern.permute.xlu0 0
    %447 = vperm.xlu0 %446, %v433
    %v448 = vpop.permute.xlu0 %447
    %451 = vset.pattern.permute.xlu0 0
    %452 = vperm.xlu0 %451, %v434
    %v453 = vpop.permute.xlu0 %452
    %456 = vset.pattern.permute.xlu0 0
    %457 = vperm.xlu0 %456, %v435
    %v458 = vpop.permute.xlu0 %457
    %461 = vset.pattern.permute.xlu0 0
    %462 = vperm.xlu0 %461, %v436
    %v463 = vpop.permute.xlu0 %462
    %466 = vset.pattern.permute.xlu0 0
    %467 = vperm.xlu0 %466, %v437
    %v468 = vpop.permute.xlu0 %467
    %471 = vset.pattern.permute.xlu0 0
    %472 = vperm.xlu0 %471, %v438
    %v473 = vpop.permute.xlu0 %472
    %476 = vset.pattern.permute.xlu0 0
    %477 = vperm.xlu0 %476, %v439
    %v478 = vpop.permute.xlu0 %477
    %v488 = vunpack.c.l.b16 %v416
    %v489 = vunpack.c.l.b16 %v417
    %v490 = vunpack.c.l.b16 %v418
    %v491 = vunpack.c.l.b16 %v419
    %v492 = vunpack.c.l.b16 %v420
    %v493 = vunpack.c.l.b16 %v421
    %v494 = vunpack.c.l.b16 %v422
    %v495 = vunpack.c.l.b16 %v423
    %v496 = vpack.c.b16 %v489, %v488
    %v497 = vpack.c.b16 %v491, %v490
    %v498 = vpack.c.b16 %v493, %v492
    %v499 = vpack.c.b16 %v495, %v494
    %504 = vmatprep.subr.bf16.mxu0 0
    %505 = vmatpush1.bf16.msra.mxu0 %v431
    %506 = vmatprep.subr.bf16.mxu0 0
    %507 = vmatpush1.bf16.msra.mxu0 %v430
    %508 = vmatprep.subr.bf16.mxu0 0
    %509 = vmatpush1.bf16.msra.mxu0 %v429
    %510 = vmatprep.subr.bf16.mxu0 0
    %511 = vmatpush1.bf16.msra.mxu0 %v428
    %512 = vmatprep.subr.bf16.mxu0 0
    %513 = vmatpush1.bf16.msra.mxu0 %v427
    %514 = vmatprep.subr.bf16.mxu0 0
    %515 = vmatpush1.bf16.msra.mxu0 %v426
    %516 = vmatprep.subr.bf16.mxu0 0
    %517 = vmatpush1.bf16.msra.mxu0 %v425
    %518 = vmatprep.subr.bf16.mxu0 0
    %519 = vmatpush1.bf16.msra.mxu0 %v424
    %520 = vmatprep.subr.bf16.mxu0 0
    %521 = vmatpush2.bf16.msra.mxu0 0
    %522 = vmatprep.subr.bf16.mxu0 0
    %523 = vmatpush2.bf16.msra.mxu0 0
    %524 = vmatprep.subr.bf16.mxu0 0
    %525 = vmatpush2.bf16.msra.mxu0 0
    %526 = vmatprep.subr.bf16.mxu0 0
    %527 = vmatpush2.bf16.msra.mxu0 0
    %528 = vmatprep.subr.bf16.mxu0 0
    %529 = vmatpush2.bf16.msra.mxu0 0
    %530 = vmatprep.subr.bf16.mxu0 0
    %531 = vmatpush2.bf16.msra.mxu0 0
    %532 = vmatprep.subr.bf16.mxu0 0
    %533 = vmatpush2.bf16.msra.mxu0 0
    %534 = vmatprep.subr.bf16.mxu0 0
    %535 = vmatpush2.bf16.msra.mxu0 0
    %536 = vmatprep.mubr.bf16.mxu0 0
    %537 = vmatmul.mubr.bf16.gmra.mxu0 %v496
    %v538 = vpop.f32.mrf.mxu0
    %v539 = vadd.f32 %v443, %v538
    %v540 = vpop.f32.mrf.mxu0
    %v541 = vpop.f32.mrf.mxu0
    %v542 = vadd.f32 %v448, %v541
    %v543 = vpop.f32.mrf.mxu0
    %544 = vmatprep.mubr.bf16.mxu0 0
    %545 = vmatmul.mubr.bf16.gmra.mxu0 %v497
    %v546 = vpop.f32.mrf.mxu0
    %v547 = vadd.f32 %v453, %v546
    %v548 = vpop.f32.mrf.mxu0
    %v549 = vpop.f32.mrf.mxu0
    %v550 = vadd.f32 %v458, %v549
    %v551 = vpop.f32.mrf.mxu0
    %552 = vmatprep.mubr.bf16.mxu0 0
    %553 = vmatmul.mubr.bf16.gmra.mxu0 %v498
    %v554 = vpop.f32.mrf.mxu0
    %v555 = vadd.f32 %v463, %v554
    %v556 = vpop.f32.mrf.mxu0
    %v557 = vpop.f32.mrf.mxu0
    %v558 = vadd.f32 %v468, %v557
    %v559 = vpop.f32.mrf.mxu0
    %560 = vmatprep.mubr.bf16.mxu0 0
    %561 = vmatmul.mubr.bf16.gmra.mxu0 %v499
    %v562 = vpop.f32.mrf.mxu0
    %v563 = vadd.f32 %v473, %v562
    %v564 = vpop.f32.mrf.mxu0
    %v565 = vpop.f32.mrf.mxu0
    %v566 = vadd.f32 %v478, %v565
    %v567 = vpop.f32.mrf.mxu0
    %568 = vdwg.mxu0
    %v569 = vmax.f32 %v539, 0.0
    %v570 = vmax.f32 %v542, 0.0
    %v571 = vmax.f32 %v547, 0.0
    %v572 = vmax.f32 %v550, 0.0
    %v573 = vmax.f32 %v555, 0.0
    %v574 = vmax.f32 %v558, 0.0
    %v575 = vmax.f32 %v563, 0.0
    %v576 = vmax.f32 %v566, 0.0
    %v577 = vld [vmem:[%s6] sm:$0xf]
    %v578 = vpack.c.bf16 %v570, %v569
    %v579 = vpack.c.bf16 %v572, %v571
    %v580 = vpack.c.bf16 %v574, %v573
    %v581 = vpack.c.bf16 %v576, %v575
    %v582 = vld [vmem:[%s7] sm:$0xff]
    %584 = vset.pattern.permute.xlu0 0
    %585 = vperm.xlu0 %584, %v582
    %v586 = vpop.permute.xlu0 %585
    %vm588 = vcmask 523264
    %v590 = vsel %vm588, %v577, 0
    %592 = vmatprep.subr.bf16.mxu0 0
    %593 = vmatpush1.bf16.msra.mxu0 0
    %594 = vmatprep.subr.bf16.mxu0 0
    %595 = vmatpush1.bf16.msra.mxu0 0
    %596 = vmatprep.subr.bf16.mxu0 0
    %597 = vmatpush1.bf16.msra.mxu0 0
    %598 = vmatprep.subr.bf16.mxu0 0
    %599 = vmatpush1.bf16.msra.mxu0 0
    %600 = vmatprep.subr.bf16.mxu0 0
    %601 = vmatpush1.bf16.msra.mxu0 %v581
    %602 = vmatprep.subr.bf16.mxu0 0
    %603 = vmatpush1.bf16.msra.mxu0 %v580
    %604 = vmatprep.subr.bf16.mxu0 0
    %605 = vmatpush1.bf16.msra.mxu0 %v579
    %606 = vmatprep.subr.bf16.mxu0 0
    %607 = vmatpush1.bf16.msra.mxu0 %v578
    %608 = vmatprep.subr.bf16.mxu0 0
    %609 = vmatpush2.bf16.msra.mxu0 0
    %610 = vmatprep.subr.bf16.mxu0 0
    %611 = vmatpush2.bf16.msra.mxu0 0
    %612 = vmatprep.subr.bf16.mxu0 0
    %613 = vmatpush2.bf16.msra.mxu0 0
    %614 = vmatprep.subr.bf16.mxu0 0
    %615 = vmatpush2.bf16.msra.mxu0 0
    %616 = vmatprep.subr.bf16.mxu0 0
    %617 = vmatpush2.bf16.msra.mxu0 0
    %618 = vmatprep.subr.bf16.mxu0 0
    %619 = vmatpush2.bf16.msra.mxu0 0
    %620 = vmatprep.subr.bf16.mxu0 0
    %621 = vmatpush2.bf16.msra.mxu0 0
    %622 = vmatprep.subr.bf16.mxu0 0
    %623 = vmatpush2.bf16.msra.mxu0 0
    %624 = vmatprep.mubr.bf16.mxu0 0
    %625 = vmatmul.mubr.bf16.gmra.mxu0 %v590
    %v626 = vpop.f32.mrf.mxu0
    %v627 = vadd.f32 %v586, %v626
    %v628 = vpop.f32.mrf.mxu0
    %v629 = vpop.f32.mrf.mxu0
    %v630 = vpop.f32.mrf.mxu0
    %631 = vdwg.mxu0
    %v632 = vmax.f32 %v627, 0.0
    %v633 = vld [vmem:[%s8] sm:$0xff]
    %635 = vset.pattern.permute.xlu0 0
    %636 = vperm.xlu0 %635, %v633
    %v637 = vpop.permute.xlu0 %636
    %v639 = vmul.f32 %v632, %v637
    %v640 = vrot.slane %v639, 4
    %v641 = vadd.f32 %v639, %v640
    %v642 = vrot.slane %v641, 2
    %v643 = vadd.f32 %v641, %v642
    %v644 = vrot.slane %v643, 1
    %v645 = vadd.f32 %v643, %v644
    %v646 = vld [vmem:[#allocation2] sm:$0x1]
    %648 = vset.pattern.permute.xlu0 0
    %649 = vperm.xlu0 %648, %v646
    %v650 = vpop.permute.xlu0 %649
    %v652 = vlaneseq
    %v653 = vshrl.u32 %v652, 7
    %v654 = vsub.s32 0, %v653
    %v655 = vrot.slane %v650, %v654
    %v656 = vadd.f32 %v645, %v655
    %657 = vst [vmem:[#allocation3] sm:$0x1] %v656
    // Predicated region
    $region42: #{tpu_custom_call.1} parent=1 // pred_check
      _
    $region43: #{tpu_custom_call.1} parent=1 // pred_check_branch
      %659 = sbr.rel (0) target = $region45
    $region44: #{tpu_custom_call.1} parent=1 // pred_region
      %s661 = ssub.s32 16, 16
      %662 = vsyncadd [#allocation4], %s661
      %s664 = sshll.u32 [#allocation3], 4
      %s665 = int_to_ptr.vmem [resolvable:$true] %s664
      %667 = dma.vmem_to_hbm [thread:$0]  %s665, 16, %s10, [#allocation4]
    $region45: #{tpu_custom_call.1} parent=1 // pred_fallthru
      _
    // Predicated region
    $region46: #{tpu_custom_call.1} parent=1 // pred_check
      _
    $region47: #{tpu_custom_call.1} parent=1 // pred_check_branch
      %669 = sbr.rel (0) target = $region49
    $region48: #{tpu_custom_call.1} parent=1 // pred_region
      %670 = dma.done [#allocation4], 16
    $region49: #{tpu_custom_call.1} parent=1 // pred_fallthru
      _
    %671 = vsyncpa [#allocation4], 1

</llo_original>
